<compile_context>
chip_gen: v7x
topology: tpu7x:2x2x1
jax: 0.10.0
libtpu: 0.0.40
codegen_flags: <defaults>
</compile_context>

<pallas_src>
import numpy as np
import jax
import jax.numpy as jnp
from jax import lax
from jax.experimental import pallas as pl
from jax.experimental.pallas import tpu as pltpu


# --------------------------------------------------------------------------------
# Pallas kernel: Bt samples per grid step, fully composed blit transform
# --------------------------------------------------------------------------------
def _blit_kernel(masks_ref, shifts_ref, x_ref, o_ref):
    """masks_ref : (Bp*5,) f32 SMEM  [m_hflip, m_rot90, m_rot180, m_rot270, m_trans]
       shifts_ref: (Bp*2,) i32 SMEM  [dh, dw]
       x_ref/o_ref: (Bt, C, N, N) f32 VMEM (H == W == N)."""
    Bt, C, N, _ = x_ref.shape
    base = pl.program_id(0) * Bt
    f32 = jnp.float32

    # grid-step-invariant basis matrices, built in-kernel (no HBM inputs for them)
    ii = lax.broadcasted_iota(jnp.int32, (N, N), 0)
    jj = lax.broadcasted_iota(jnp.int32, (N, N), 1)
    I_m = (ii == jj).astype(f32)              # identity
    J_m = (ii + jj == N - 1).astype(f32)      # anti-diagonal reversal

    def body(i, carry):
        s = base + i
        m_h   = masks_ref[5 * s + 0]          # hflip selected           (0.0 / 1.0)
        m_90  = masks_ref[5 * s + 1]          # rotate  90 deg selected
        m_180 = masks_ref[5 * s + 2]          # rotate 180 deg selected
        m_270 = masks_ref[5 * s + 3]          # rotate 270 deg selected
        m_t   = masks_ref[5 * s + 4]          # translate selected
        dh    = shifts_ref[2 * s + 0]         # row shift (int32)
        dw    = shifts_ref[2 * s + 1]         # col shift (int32)

        # ---- scalar (sreg) coefficient algebra --------------------------------
        # The whole hflip -> rot -> translate pipeline collapses per sample to
        #   y = (L1 @ x + L2 @ x^T) @ R        (L2 != 0 only for the 90/270 branch)
        # with L1, L2 blends of {I, J, A, A@J} and R a blend of {I, J, B, J@B}.
        sel_T = m_90 + m_270                  # branches that act on x^T
        nt    = 1.0 - sel_T
        kt    = 1.0 - m_t

        aL_T  = m_90 * m_h + m_270 * (1.0 - m_h)
        bL_T  = m_90 * (1.0 - m_h) + m_270 * m_h
        aR_nt = m_h * m_180 + (1.0 - m_h) * (1.0 - m_180)
        bR_nt = m_h * (1.0 - m_180) + (1.0 - m_h) * m_180
        aR = m_90 + nt * aR_nt
        bR = m_270 + nt * bR_nt

        cI1, cJ1  = nt * kt * (1.0 - m_180), nt * kt * m_180
        cA1, cAJ1 = nt * m_t * (1.0 - m_180), nt * m_t * m_180
        cI2, cJ2  = kt * aL_T, kt * bL_T
        cA2, cAJ2 = m_t * aL_T, m_t * bL_T
        cIR, cJR  = kt * aR, kt * bR
        cB, cJB   = m_t * aR, m_t * bR

        # dynamic one-hot shift matrices (translation) and their J-composites
        A_m  = (ii - jj == dh).astype(f32)            # (A@z)[i,:] = z[i-dh,:]
        AJ_m = (ii + jj == N - 1 + dh).astype(f32)    # A @ J
        B_m  = (jj - ii == dw).astype(f32)            # (z@B)[:,j] = z[:,j-dw]
        JB_m = (ii + jj == N - 1 + dw).astype(f32)    # J @ B

        L1 = cI1 * I_m + cJ1 * J_m + cA1 * A_m + cAJ1 * AJ_m
        L2 = cI2 * I_m + cJ2 * J_m + cA2 * A_m + cAJ2 * AJ_m
        R  = cIR * I_m + cJR * J_m + cB * B_m + cJB * JB_m

        # ---- apply: y[c] = (L1 @ x[c] + L2 @ x[c]^T) @ R, channels as batch ----
        x_s  = x_ref[i]                               # (C, N, N)
        L1_b = jnp.broadcast_to(L1, (C, N, N))
        L2_b = jnp.broadcast_to(L2, (C, N, N))
        R_b  = jnp.broadcast_to(R, (C, N, N))

        t = (jnp.einsum('cij,cjk->cik', L1_b, x_s, preferred_element_type=f32)
             + jnp.einsum('cij,ckj->cik', L2_b, x_s, preferred_element_type=f32))
        y = jnp.einsum('cij,cjk->cik', t, R_b, preferred_element_type=f32)

        # translation out-of-range fill with -1 (only when translation selected)
        valid = ((ii - dh >= 0) & (ii - dh < N)
                 & (jj - dw >= 0) & (jj - dw < N)).astype(f32)
        y = y + m_t * (valid - 1.0)

        o_ref[i] = y.astype(o_ref.dtype)
        return carry

    lax.fori_loop(0, Bt, body, 0)


def _blit_pallas(images, masks, shifts, *, target_block_bytes=2 << 20):
    B, C, H, W = images.shape
    assert H == W, "square images assumed (matches the 90/180/270 rotation classes)"
    orig_dtype = images.dtype
    images = images.astype(jnp.float32)

    per_sample = C * H * W * 4
    Bt = int(max(1, min(B, target_block_bytes // per_sample)))   # samples per grid step
    Bp = ((B + Bt - 1) // Bt) * Bt
    if Bp != B:
        pad = Bp - B
        images = jnp.concatenate(
            [images, jnp.zeros((pad, C, H, W), jnp.float32)], axis=0)
        masks = jnp.concatenate(
            [masks, jnp.zeros((pad, 5), masks.dtype)], axis=0)
        shifts = jnp.concatenate(
            [shifts, jnp.zeros((pad, 2), shifts.dtype)], axis=0)

    masks_flat = masks.astype(jnp.float32).reshape(-1)     # (Bp*5,) f32, 1D SMEM
    shifts_flat = shifts.astype(jnp.int32).reshape(-1)     # (Bp*2,) i32, 1D SMEM

    block_bytes = Bt * per_sample
    vmem_limit = int(min(48 * 1024 * 1024,
                         max(32 * 1024 * 1024, 4 * block_bytes + 16 * 1024 * 1024)))

    smem_spec = pl.BlockSpec(memory_space=pltpu.MemorySpace.SMEM)
    out = pl.pallas_call(
        _blit_kernel,
        out_shape=jax.ShapeDtypeStruct((Bp, C, H, W), jnp.float32),
        grid=(Bp // Bt,),
        in_specs=[
            smem_spec,                                            # masks  (Bp*5,) f32
            smem_spec,                                            # shifts (Bp*2,) i32
            pl.BlockSpec((Bt, C, H, W), lambda g: (g, 0, 0, 0)),  # images
        ],
        out_specs=pl.BlockSpec((Bt, C, H, W), lambda g: (g, 0, 0, 0)),
        compiler_params=pltpu.CompilerParams(
            dimension_semantics=("parallel",),
            vmem_limit_bytes=vmem_limit,
        ),
    )(masks_flat, shifts_flat, images)
    return out[:B].astype(orig_dtype)


# --------------------------------------------------------------------------------
# Glue: per-sample random draws, mirroring apply_transfo_random / translate logic
# --------------------------------------------------------------------------------
def _draw_blit_params(key, shape, blit, p, deform):
    B, C, H, W = shape
    k1, k2, k3, k4, k5 = jax.random.split(key, 5)

    # hflip: classes=(None,) -> mask = (trans >= 1 - p) & (trans < 1)
    p_h = blit * p
    t1 = jax.random.uniform(k1, (B,))
    m_h = ((t1 >= 1.0 - p_h) & (t1 < 1.0)).astype(jnp.float32)

    # rotate: classes=(90,180,270) -> three mutually exclusive slices of width p/3
    p_r = blit * p
    p_slice = p_r / 3.0
    t2 = jax.random.uniform(k2, (B,))
    m_rot = [((t2 >= 1.0 - p_r + i * p_slice) &
              (t2 < 1.0 - p_r + (i + 1) * p_slice)).astype(jnp.float32)
             for i in range(3)]

    # translate: prob blit*p*deform, shift = int(0.125*d*(2u-1))  (trunc toward 0)
    p_t = blit * p * float(deform)
    t3 = jax.random.uniform(k3, (B,))
    m_t = (t3 < p_t).astype(jnp.float32)
    sh_h = jnp.trunc(0.125 * H * (jax.random.uniform(k4, (B,)) * 2.0 - 1.0)).astype(jnp.int32)
    sh_w = jnp.trunc(0.125 * W * (jax.random.uniform(k5, (B,)) * 2.0 - 1.0)).astype(jnp.int32)

    masks = jnp.stack([m_h, m_rot[0], m_rot[1], m_rot[2], m_t], axis=1)   # (B, 5) f32
    shifts = jnp.stack([sh_h, sh_w], axis=1)                              # (B, 2) i32
    return masks, shifts


class AugmentPipe:
    """JAX/Pallas port of the PyTorch AugmentPipe (blit path)."""

    def __init__(self, blit=0, geom=0, color=0, deform=True):
        self.p = 0.0
        self.adjust = 0.0
        self.blit = blit
        self.geom = geom
        self.color = color
        self.deform = deform
        self.buff = []

    def update_p(self, val):
        self.buff.append(np.asarray(val))
        if len(self.buff) >= 4:
            self.adjust = float(np.sign(np.concatenate(self.buff).mean() - 0.6)
                                * len(self.buff) * len(self.buff[0]) / (100 * 1000))
            self.p = min(1.0, max(0.0, self.p + self.adjust))
            self.buff = []

    def forward(self, images, key):
        assert images.ndim == 4
        if self.blit > 0:
            masks, shifts = _draw_blit_params(key, images.shape,
                                              self.blit, self.p, self.deform)
            images = _blit_pallas(images, masks, shifts)
        # TODO(synk): geom>0 / color>0 paths (torchvision f.resize, affine_grid +
        # grid_sample arbitrary-angle rotation, ColorJitter) have no clean Pallas
        # equivalent; with the module defaults (geom=0, color=0) they are no-ops.
        return images


# --------------------------------------------------------------------------------
# Pure numpy reference of the same per-sample semantics (for verification)
# --------------------------------------------------------------------------------
def _reference(images, masks, shifts):
    imgs = np.asarray(images, dtype=np.float32)
    masks = np.asarray(masks)
    shifts = np.asarray(shifts)
    B, C, H, W = imgs.shape
    out = imgs.copy()
    for s in range(B):
        x = imgs[s]
        if masks[s, 0] > 0.5:
            x = x[:, :, ::-1]
        if masks[s, 1] > 0.5:
            x = np.rot90(x, k=1, axes=(1, 2))
        elif masks[s, 2] > 0.5:
            x = np.rot90(x, k=2, axes=(1, 2))
        elif masks[s, 3] > 0.5:
            x = np.rot90(x, k=3, axes=(1, 2))
        if masks[s, 4] > 0.5:
            dh, dw = int(shifts[s, 0]), int(shifts[s, 1])
            new = np.full_like(x, -1.0)
            for i in range(H):
                for j in range(W):
                    if 0 <= i - dh < H and 0 <= j - dw < W:
                        new[:, i, j] = x[:, i - dh, j - dw]
            x = new
        out[s] = x
    return out


# --------------------------------------------------------------------------------
if __name__ == "__main__":
    key = jax.random.PRNGKey(0)
    k_img, k_aug, k_img2, k_aug2 = jax.random.split(key, 4)

    # ---- Test A: single grid step (Bt == B) ------------------------------------
    B, C, H, W = 4, 3, 16, 16
    images = jax.random.uniform(k_img, (B, C, H, W), jnp.float32, -1.0, 1.0)

    pipe = AugmentPipe(blit=1, geom=0, color=0, deform=True)
    pipe.p = 0.9  # AugmentPipe.p is normally adapted via update_p; set >0 so blit fires

    masks, shifts = _draw_blit_params(k_aug, images.shape, pipe.blit, pipe.p, pipe.deform)
    out = jax.block_until_ready(_blit_pallas(images, masks, shifts))
    ref = _reference(images, masks, shifts)
    np.testing.assert_allclose(np.asarray(out), ref, atol=1e-5, rtol=0)

    # class wrapper with the same key must reproduce the same result
    out_fwd = jax.block_until_ready(pipe.forward(images, k_aug))
    np.testing.assert_allclose(np.asarray(out_fwd), ref, atol=1e-5, rtol=0)

    # ---- Test B: odd batch -> multi grid step + batch padding path -------------
    B2, C2 = 3, 4
    images2 = jax.random.uniform(k_img2, (B2, C2, H, W), jnp.float32, -1.0, 1.0)
    masks2, shifts2 = _draw_blit_params(k_aug2, images2.shape, 1, 0.9, True)
    per_sample = C2 * H * W * 4
    out2 = jax.block_until_ready(
        _blit_pallas(images2, masks2, shifts2, target_block_bytes=2 * per_sample))
    ref2 = _reference(images2, masks2, shifts2)
    np.testing.assert_allclose(np.asarray(out2), ref2, atol=1e-5, rtol=0)

    print("KERNEL_OK")
</pallas_src>

<mosaic_0001>
module attributes {stable_mosaic.version = 11 : i64} {
  func.func @_blit_kernel(%arg0: i32, %arg1: memref<20xf32, #tpu.memory_space<smem>>, %arg2: memref<8xi32, #tpu.memory_space<smem>>, %arg3: memref<4x3x16x16xf32, #tpu.memory_space<vmem>>, %arg4: memref<4x3x16x16xf32, #tpu.memory_space<vmem>>) attributes {dimension_semantics = [#tpu.dimension_semantics<parallel>], iteration_bounds = array<i64: 1>, scalar_prefetch = 0 : i64, scratch_operands = 0 : i64, tpu.core_type = #tpu.core_type<tc>, window_params = [{transform_indices = @transform_0, window_bounds = array<i64: 20>}, {transform_indices = @transform_1, window_bounds = array<i64: 8>}, {transform_indices = @transform_2, window_bounds = array<i64: 4, 3, 16, 16>}, {transform_indices = @transform_3, window_bounds = array<i64: 4, 3, 16, 16>}]} {
    %c4_i32 = arith.constant 4 : i32
    %0 = arith.muli %arg0, %c4_i32 : i32
    %1 = tpu.iota {dimensions = array<i32: 0>} : vector<16x16xi32>
    %2 = tpu.iota {dimensions = array<i32: 1>} : vector<16x16xi32>
    %3 = arith.cmpi eq, %1, %2 : vector<16x16xi32>
    %4 = arith.extui %3 : vector<16x16xi1> to vector<16x16xi32>
    %5 = arith.sitofp %4 : vector<16x16xi32> to vector<16x16xf32>
    %6 = arith.addi %1, %2 : vector<16x16xi32>
    %c15_i32 = arith.constant 15 : i32
    %7 = vector.broadcast %c15_i32 : i32 to vector<16x16xi32>
    %8 = arith.cmpi eq, %6, %7 : vector<16x16xi32>
    %9 = arith.extui %8 : vector<16x16xi1> to vector<16x16xi32>
    %10 = arith.sitofp %9 : vector<16x16xi32> to vector<16x16xf32>
    %c0_i32 = arith.constant 0 : i32
    %c4_i32_0 = arith.constant 4 : i32
    %11 = arith.addi %c0_i32, %c4_i32_0 : i32
    %c1_i32 = arith.constant 1 : i32
    scf.for %arg5 = %c0_i32 to %11 step %c1_i32  : i32 {
      %12 = arith.addi %0, %arg5 : i32
      %c5_i32 = arith.constant 5 : i32
      %13 = arith.muli %c5_i32, %12 : i32
      %c0_i32_2 = arith.constant 0 : i32
      %14 = arith.addi %13, %c0_i32_2 : i32
      %15 = arith.index_cast %14 : i32 to index
      %16 = memref.load %arg1[%15] : memref<20xf32, #tpu.memory_space<smem>>
      %c5_i32_3 = arith.constant 5 : i32
      %17 = arith.muli %c5_i32_3, %12 : i32
      %c1_i32_4 = arith.constant 1 : i32
      %18 = arith.addi %17, %c1_i32_4 : i32
      %19 = arith.index_cast %18 : i32 to index
      %20 = memref.load %arg1[%19] : memref<20xf32, #tpu.memory_space<smem>>
      %c5_i32_5 = arith.constant 5 : i32
      %21 = arith.muli %c5_i32_5, %12 : i32
      %c2_i32 = arith.constant 2 : i32
      %22 = arith.addi %21, %c2_i32 : i32
      %23 = arith.index_cast %22 : i32 to index
      %24 = memref.load %arg1[%23] : memref<20xf32, #tpu.memory_space<smem>>
      %c5_i32_6 = arith.constant 5 : i32
      %25 = arith.muli %c5_i32_6, %12 : i32
      %c3_i32 = arith.constant 3 : i32
      %26 = arith.addi %25, %c3_i32 : i32
      %27 = arith.index_cast %26 : i32 to index
      %28 = memref.load %arg1[%27] : memref<20xf32, #tpu.memory_space<smem>>
      %c5_i32_7 = arith.constant 5 : i32
      %29 = arith.muli %c5_i32_7, %12 : i32
      %c4_i32_8 = arith.constant 4 : i32
      %30 = arith.addi %29, %c4_i32_8 : i32
      %31 = arith.index_cast %30 : i32 to index
      %32 = memref.load %arg1[%31] : memref<20xf32, #tpu.memory_space<smem>>
      %c2_i32_9 = arith.constant 2 : i32
      %33 = arith.muli %c2_i32_9, %12 : i32
      %c0_i32_10 = arith.constant 0 : i32
      %34 = arith.addi %33, %c0_i32_10 : i32
      %35 = arith.index_cast %34 : i32 to index
      %36 = memref.load %arg2[%35] : memref<8xi32, #tpu.memory_space<smem>>
      %c2_i32_11 = arith.constant 2 : i32
      %37 = arith.muli %c2_i32_11, %12 : i32
      %c1_i32_12 = arith.constant 1 : i32
      %38 = arith.addi %37, %c1_i32_12 : i32
      %39 = arith.index_cast %38 : i32 to index
      %40 = memref.load %arg2[%39] : memref<8xi32, #tpu.memory_space<smem>>
      %41 = arith.addf %20, %28 : f32
      %cst = arith.constant 1.000000e+00 : f32
      %42 = arith.subf %cst, %41 : f32
      %cst_13 = arith.constant 1.000000e+00 : f32
      %43 = arith.subf %cst_13, %32 : f32
      %44 = arith.mulf %20, %16 : f32
      %cst_14 = arith.constant 1.000000e+00 : f32
      %45 = arith.subf %cst_14, %16 : f32
      %46 = arith.mulf %28, %45 : f32
      %47 = arith.addf %44, %46 : f32
      %cst_15 = arith.constant 1.000000e+00 : f32
      %48 = arith.subf %cst_15, %16 : f32
      %49 = arith.mulf %20, %48 : f32
      %50 = arith.mulf %28, %16 : f32
      %51 = arith.addf %49, %50 : f32
      %52 = arith.mulf %16, %24 : f32
      %cst_16 = arith.constant 1.000000e+00 : f32
      %53 = arith.subf %cst_16, %16 : f32
      %cst_17 = arith.constant 1.000000e+00 : f32
      %54 = arith.subf %cst_17, %24 : f32
      %55 = arith.mulf %53, %54 : f32
      %56 = arith.addf %52, %55 : f32
      %cst_18 = arith.constant 1.000000e+00 : f32
      %57 = arith.subf %cst_18, %24 : f32
      %58 = arith.mulf %16, %57 : f32
      %cst_19 = arith.constant 1.000000e+00 : f32
      %59 = arith.subf %cst_19, %16 : f32
      %60 = arith.mulf %59, %24 : f32
      %61 = arith.addf %58, %60 : f32
      %62 = arith.mulf %42, %56 : f32
      %63 = arith.addf %20, %62 : f32
      %64 = arith.mulf %42, %61 : f32
      %65 = arith.addf %28, %64 : f32
      %66 = arith.mulf %42, %43 : f32
      %cst_20 = arith.constant 1.000000e+00 : f32
      %67 = arith.subf %cst_20, %24 : f32
      %68 = arith.mulf %66, %67 : f32
      %69 = arith.mulf %42, %43 : f32
      %70 = arith.mulf %69, %24 : f32
      %71 = arith.mulf %42, %32 : f32
      %cst_21 = arith.constant 1.000000e+00 : f32
      %72 = arith.subf %cst_21, %24 : f32
      %73 = arith.mulf %71, %72 : f32
      %74 = arith.mulf %42, %32 : f32
      %75 = arith.mulf %74, %24 : f32
      %76 = arith.mulf %43, %47 : f32
      %77 = arith.mulf %43, %51 : f32
      %78 = arith.mulf %32, %47 : f32
      %79 = arith.mulf %32, %51 : f32
      %80 = arith.mulf %43, %63 : f32
      %81 = arith.mulf %43, %65 : f32
      %82 = arith.mulf %32, %63 : f32
      %83 = arith.mulf %32, %65 : f32
      %84 = arith.subi %1, %2 : vector<16x16xi32>
      %85 = vector.broadcast %36 : i32 to vector<16x16xi32>
      %86 = arith.cmpi eq, %84, %85 : vector<16x16xi32>
      %87 = arith.extui %86 : vector<16x16xi1> to vector<16x16xi32>
      %88 = arith.sitofp %87 : vector<16x16xi32> to vector<16x16xf32>
      %89 = arith.addi %1, %2 : vector<16x16xi32>
      %c15_i32_22 = arith.constant 15 : i32
      %90 = arith.addi %c15_i32_22, %36 : i32
      %91 = vector.broadcast %90 : i32 to vector<16x16xi32>
      %92 = arith.cmpi eq, %89, %91 : vector<16x16xi32>
      %93 = arith.extui %92 : vector<16x16xi1> to vector<16x16xi32>
      %94 = arith.sitofp %93 : vector<16x16xi32> to vector<16x16xf32>
      %95 = arith.subi %2, %1 : vector<16x16xi32>
      %96 = vector.broadcast %40 : i32 to vector<16x16xi32>
      %97 = arith.cmpi eq, %95, %96 : vector<16x16xi32>
      %98 = arith.extui %97 : vector<16x16xi1> to vector<16x16xi32>
      %99 = arith.sitofp %98 : vector<16x16xi32> to vector<16x16xf32>
      %100 = arith.addi %1, %2 : vector<16x16xi32>
      %c15_i32_23 = arith.constant 15 : i32
      %101 = arith.addi %c15_i32_23, %40 : i32
      %102 = vector.broadcast %101 : i32 to vector<16x16xi32>
      %103 = arith.cmpi eq, %100, %102 : vector<16x16xi32>
      %104 = arith.extui %103 : vector<16x16xi1> to vector<16x16xi32>
      %105 = arith.sitofp %104 : vector<16x16xi32> to vector<16x16xf32>
      %106 = vector.broadcast %68 : f32 to vector<16x16xf32>
      %107 = arith.mulf %106, %5 : vector<16x16xf32>
      %108 = vector.broadcast %70 : f32 to vector<16x16xf32>
      %109 = arith.mulf %108, %10 : vector<16x16xf32>
      %110 = arith.addf %107, %109 : vector<16x16xf32>
      %111 = vector.broadcast %73 : f32 to vector<16x16xf32>
      %112 = arith.mulf %111, %88 : vector<16x16xf32>
      %113 = arith.addf %110, %112 : vector<16x16xf32>
      %114 = vector.broadcast %75 : f32 to vector<16x16xf32>
      %115 = arith.mulf %114, %94 : vector<16x16xf32>
      %116 = arith.addf %113, %115 : vector<16x16xf32>
      %117 = vector.broadcast %76 : f32 to vector<16x16xf32>
      %118 = arith.mulf %117, %5 : vector<16x16xf32>
      %119 = vector.broadcast %77 : f32 to vector<16x16xf32>
      %120 = arith.mulf %119, %10 : vector<16x16xf32>
      %121 = arith.addf %118, %120 : vector<16x16xf32>
      %122 = vector.broadcast %78 : f32 to vector<16x16xf32>
      %123 = arith.mulf %122, %88 : vector<16x16xf32>
      %124 = arith.addf %121, %123 : vector<16x16xf32>
      %125 = vector.broadcast %79 : f32 to vector<16x16xf32>
      %126 = arith.mulf %125, %94 : vector<16x16xf32>
      %127 = arith.addf %124, %126 : vector<16x16xf32>
      %128 = vector.broadcast %80 : f32 to vector<16x16xf32>
      %129 = arith.mulf %128, %5 : vector<16x16xf32>
      %130 = vector.broadcast %81 : f32 to vector<16x16xf32>
      %131 = arith.mulf %130, %10 : vector<16x16xf32>
      %132 = arith.addf %129, %131 : vector<16x16xf32>
      %133 = vector.broadcast %82 : f32 to vector<16x16xf32>
      %134 = arith.mulf %133, %99 : vector<16x16xf32>
      %135 = arith.addf %132, %134 : vector<16x16xf32>
      %136 = vector.broadcast %83 : f32 to vector<16x16xf32>
      %137 = arith.mulf %136, %105 : vector<16x16xf32>
      %138 = arith.addf %135, %137 : vector<16x16xf32>
      %139 = arith.index_cast %arg5 : i32 to index
      %c0 = arith.constant 0 : index
      %c0_24 = arith.constant 0 : index
      %c0_25 = arith.constant 0 : index
      %140 = vector.load %arg3[%139, %c0, %c0_24, %c0_25] : memref<4x3x16x16xf32, #tpu.memory_space<vmem>>, vector<1x3x16x16xf32>
      %141 = vector.shape_cast %140 : vector<1x3x16x16xf32> to vector<3x16x16xf32>
      %142 = vector.shape_cast %116 : vector<16x16xf32> to vector<1x16x16xf32>
      %143 = vector.broadcast %142 : vector<1x16x16xf32> to vector<3x16x16xf32>
      %144 = vector.shape_cast %127 : vector<16x16xf32> to vector<1x16x16xf32>
      %145 = vector.broadcast %144 : vector<1x16x16xf32> to vector<3x16x16xf32>
      %146 = vector.shape_cast %138 : vector<16x16xf32> to vector<1x16x16xf32>
      %147 = vector.broadcast %146 : vector<1x16x16xf32> to vector<3x16x16xf32>
      "tpu.trace_start"() <{level = 10 : i32, message = "cij,cjk->cik"}> : () -> ()
      %cst_26 = arith.constant dense<0.000000e+00> : vector<3x16x16xf32>
      %148 = tpu.matmul %143, %141, %cst_26 {dimension_numbers = #tpu.dot_dimension_numbers<[2], [1], [1], [2], [0, 0, 0, 1, 1, 2], [0], [0]>} : vector<3x16x16xf32>, vector<3x16x16xf32>, vector<3x16x16xf32> -> vector<3x16x16xf32>
      "tpu.trace_stop"() : () -> ()
      "tpu.trace_start"() <{level = 10 : i32, message = "cij,ckj->cik"}> : () -> ()
      %cst_27 = arith.constant dense<0.000000e+00> : vector<3x16x16xf32>
      %149 = tpu.matmul %145, %141, %cst_27 {dimension_numbers = #tpu.dot_dimension_numbers<[2], [2], [1], [1], [0, 0, 0, 1, 1, 1], [0], [0]>} : vector<3x16x16xf32>, vector<3x16x16xf32>, vector<3x16x16xf32> -> vector<3x16x16xf32>
      "tpu.trace_stop"() : () -> ()
      %150 = arith.addf %148, %149 : vector<3x16x16xf32>
      "tpu.trace_start"() <{level = 10 : i32, message = "cij,cjk->cik"}> : () -> ()
      %cst_28 = arith.constant dense<0.000000e+00> : vector<3x16x16xf32>
      %151 = tpu.matmul %150, %147, %cst_28 {dimension_numbers = #tpu.dot_dimension_numbers<[2], [1], [1], [2], [0, 0, 0, 1, 1, 2], [0], [0]>} : vector<3x16x16xf32>, vector<3x16x16xf32>, vector<3x16x16xf32> -> vector<3x16x16xf32>
      "tpu.trace_stop"() : () -> ()
      %152 = vector.broadcast %36 : i32 to vector<16x16xi32>
      %153 = arith.subi %1, %152 : vector<16x16xi32>
      %c0_i32_29 = arith.constant 0 : i32
      %154 = vector.broadcast %c0_i32_29 : i32 to vector<16x16xi32>
      %155 = arith.cmpi sge, %153, %154 : vector<16x16xi32>
      %156 = vector.broadcast %36 : i32 to vector<16x16xi32>
      %157 = arith.subi %1, %156 : vector<16x16xi32>
      %c16_i32 = arith.constant 16 : i32
      %158 = vector.broadcast %c16_i32 : i32 to vector<16x16xi32>
      %159 = arith.cmpi slt, %157, %158 : vector<16x16xi32>
      %160 = arith.andi %155, %159 : vector<16x16xi1>
      %161 = vector.broadcast %40 : i32 to vector<16x16xi32>
      %162 = arith.subi %2, %161 : vector<16x16xi32>
      %c0_i32_30 = arith.constant 0 : i32
      %163 = vector.broadcast %c0_i32_30 : i32 to vector<16x16xi32>
      %164 = arith.cmpi sge, %162, %163 : vector<16x16xi32>
      %165 = arith.andi %160, %164 : vector<16x16xi1>
      %166 = vector.broadcast %40 : i32 to vector<16x16xi32>
      %167 = arith.subi %2, %166 : vector<16x16xi32>
      %c16_i32_31 = arith.constant 16 : i32
      %168 = vector.broadcast %c16_i32_31 : i32 to vector<16x16xi32>
      %169 = arith.cmpi slt, %167, %168 : vector<16x16xi32>
      %170 = arith.andi %165, %169 : vector<16x16xi1>
      %171 = arith.extui %170 : vector<16x16xi1> to vector<16x16xi32>
      %172 = arith.sitofp %171 : vector<16x16xi32> to vector<16x16xf32>
      %cst_32 = arith.constant 1.000000e+00 : f32
      %173 = vector.broadcast %cst_32 : f32 to vector<16x16xf32>
      %174 = arith.subf %172, %173 : vector<16x16xf32>
      %175 = vector.broadcast %32 : f32 to vector<16x16xf32>
      %176 = arith.mulf %175, %174 : vector<16x16xf32>
      %177 = vector.shape_cast %176 : vector<16x16xf32> to vector<1x16x16xf32>
      %178 = vector.broadcast %177 : vector<1x16x16xf32> to vector<3x16x16xf32>
      %179 = arith.addf %151, %178 : vector<3x16x16xf32>
      %180 = arith.index_cast %arg5 : i32 to index
      %c0_33 = arith.constant 0 : index
      %c0_34 = arith.constant 0 : index
      %c0_35 = arith.constant 0 : index
      %181 = vector.load %arg4[%180, %c0_33, %c0_34, %c0_35] : memref<4x3x16x16xf32, #tpu.memory_space<vmem>>, vector<1x3x16x16xf32>
      %182 = vector.shape_cast %181 : vector<1x3x16x16xf32> to vector<3x16x16xf32>
      %183 = vector.shape_cast %179 : vector<3x16x16xf32> to vector<1x3x16x16xf32>
      tpu.vector_store %arg4[%180, %c0_33, %c0_34, %c0_35], %183 {strides = array<i32>} : memref<4x3x16x16xf32, #tpu.memory_space<vmem>>, vector<1x3x16x16xf32>,
    }
    %c4_i32_1 = arith.constant 4 : i32
    return
  }
  func.func @transform_0(%arg0: i32) -> i32 {
    %c0_i32 = arith.constant 0 : i32
    %c0_i32_0 = arith.constant 0 : i32
    return %c0_i32 : i32
  }
  func.func @transform_1(%arg0: i32) -> i32 {
    %c0_i32 = arith.constant 0 : i32
    %c0_i32_0 = arith.constant 0 : i32
    return %c0_i32 : i32
  }
  func.func @transform_2(%arg0: i32) -> (i32, i32, i32, i32) {
    %c0_i32 = arith.constant 0 : i32
    %c0_i32_0 = arith.constant 0 : i32
    %c0_i32_1 = arith.constant 0 : i32
    %c0_i32_2 = arith.constant 0 : i32
    return %arg0, %c0_i32, %c0_i32_0, %c0_i32_1 : i32, i32, i32, i32
  }
  func.func @transform_3(%arg0: i32) -> (i32, i32, i32, i32) {
    %c0_i32 = arith.constant 0 : i32
    %c0_i32_0 = arith.constant 0 : i32
    %c0_i32_1 = arith.constant 0 : i32
    %c0_i32_2 = arith.constant 0 : i32
    return %arg0, %c0_i32, %c0_i32_0, %c0_i32_1 : i32, i32, i32, i32
  }
}

</mosaic_0001>

<llo_original>
// kernel: tpu_custom_call.1
$region0: #{tpu_custom_call.1}
  #allocation0 [shape = 'u32[]', space=smem, size = 0x4, offset = 0x4, fixed_abs, tag = 'smem constant byte address 0x4 - core index']
  #allocation1 [shape = 'u32[144,128]{1,0:T(1,128)}', space=vmem, size = 0x12000, scoped, tag = 'internal scratch']
  %s0 = inlined_call_operand.hbm [shape: f32[20], index: 0, kind: input, shape index: {}]
  %s1 = inlined_call_operand.vmem [shape: s32[8], index: 1, kind: input, shape index: {}]
  %s2 = inlined_call_operand.hbm [shape: f32[4,3,16,16], index: 2, kind: input, shape index: {}]
  %s3 = inlined_call_operand.hbm [shape: f32[4,3,16,16], index: 3, kind: output, shape index: {}]
  %s4 = sld [smem:[#allocation0]]
  $region41: #{tpu_custom_call.1} parent=0
    _
  %s6 = ssub.s32 1, %s4
  %s7 = scalar_select 0, %s6, %s4
  $region1: #{tpu_custom_call.1} parent=0
    #allocation2 [shape = 'u8[512]{0}', space=smem, size = 0x200, scoped, tag = 'input window, operand 0, single buffered']
    #allocation3 [shape = 's32[1]{0}', space=sflag, size = 0x4, scoped, tag = 'scoped memory for tpu_custom_call.1']
    #allocation4 [shape = 's32[1]{0}', space=sflag, size = 0x4, scoped, tag = 'scoped memory for tpu_custom_call.1']
    #allocation5 [shape = 's32[1]{0}', space=sflag, size = 0x4, scoped, tag = 'scoped memory for tpu_custom_call.1']
    #allocation6 [shape = 's32[1]{0}', space=sflag, size = 0x4, scoped, tag = 'scoped memory for tpu_custom_call.1']
    #allocation7 [shape = 'u8[512]{0}', space=smem, size = 0x200, scoped, tag = 'input window, operand 1, single buffered']
    #allocation8 [shape = 'u8[98304]{0}', space=vmem, size = 0x18000, scoped, tag = 'input window, operand 2, single buffered']
    #allocation9 [shape = 'u8[98304]{0}', space=vmem, size = 0x18000, scoped, tag = 'output window, operand 0, single buffered']
    %8 = vsyncpa [#allocation5], 0
    %9 = vsyncpa [#allocation6], 0
    %10 = vsyncpa [#allocation3], 0
    %11 = vsyncpa [#allocation4], 0
    // Predicated region
    $region2: #{tpu_custom_call.1} parent=1 // pred_check
      _
    $region3: #{tpu_custom_call.1} parent=1 // pred_check_branch
      %13 = sbr.rel (0) target = $region5
    $region4: #{tpu_custom_call.1} parent=1 // pred_region
      %s15 = ssub.s32 16, 16
      %16 = vsyncadd [#allocation5], %s15
      %19 = dma.hbm_to_smem %s0, 16, [#allocation2], [#allocation5]
    $region5: #{tpu_custom_call.1} parent=1 // pred_fallthru
      _
    // Predicated region
    $region6: #{tpu_custom_call.1} parent=1 // pred_check
      _
    $region7: #{tpu_custom_call.1} parent=1 // pred_check_branch
      %21 = sbr.rel (0) target = $region9
    $region8: #{tpu_custom_call.1} parent=1 // pred_region
      %s23 = ssub.s32 16, 16
      %24 = vsyncadd [#allocation6], %s23
      %s26 = sshll.u32 %s1, 4
      %s27 = int_to_ptr.vmem [resolvable:$true] %s26
      %29 = dma.vmem_to_smem %s27, 16, [#allocation7], [#allocation6]
    $region9: #{tpu_custom_call.1} parent=1 // pred_fallthru
      _
    // Predicated region
    $region10: #{tpu_custom_call.1} parent=1 // pred_check
      _
    $region11: #{tpu_custom_call.1} parent=1 // pred_check_branch
      %31 = sbr.rel (0) target = $region13
    $region12: #{tpu_custom_call.1} parent=1 // pred_region
      %s33 = ssub.s32 3072, 3072
      %34 = vsyncadd [#allocation3], %s33
      %s35 = sshll.u32 [#allocation8], 4
      %s36 = int_to_ptr.vmem [resolvable:$true] %s35
      %41 = dma.hbm_to_vmem [thread:$0]  %s2, 3072, %s36, [#allocation3], 128, 128, 8
    $region13: #{tpu_custom_call.1} parent=1 // pred_fallthru
      _
    // Predicated region
    $region14: #{tpu_custom_call.1} parent=1 // pred_check
      _
    $region15: #{tpu_custom_call.1} parent=1 // pred_check_branch
      %43 = sbr.rel (0) target = $region17
    $region16: #{tpu_custom_call.1} parent=1 // pred_region
      %44 = dma.done [#allocation5], 16
    $region17: #{tpu_custom_call.1} parent=1 // pred_fallthru
      _
    // Predicated region
    $region18: #{tpu_custom_call.1} parent=1 // pred_check
      _
    $region19: #{tpu_custom_call.1} parent=1 // pred_check_branch
      %46 = sbr.rel (0) target = $region21
    $region20: #{tpu_custom_call.1} parent=1 // pred_region
      %47 = dma.done [#allocation6], 16
    $region21: #{tpu_custom_call.1} parent=1 // pred_fallthru
      _
    // Predicated region
    $region22: #{tpu_custom_call.1} parent=1 // pred_check
      _
    $region23: #{tpu_custom_call.1} parent=1 // pred_check_branch
      %49 = sbr.rel (0) target = $region25
    $region24: #{tpu_custom_call.1} parent=1 // pred_region
      %50 = dma.done [#allocation3], 3072
    $region25: #{tpu_custom_call.1} parent=1 // pred_fallthru
      _
    %51 = sfence
    %s52 = smul.u32 0, 4
    %v53 = vlaneseq
    %v54 = vshrl.u32 %v53, 7
    %v55 = vadd.s32 %v54, 8
    %v56 = vlaneseq
    %v57 = vand.u32 %v56, 127
    %vm58 = vcmp.eq.s32.totalorder %v54, %v57
    %vm59 = vcmp.eq.s32.totalorder %v55, %v57
    %v60 = vsel %vm58, 1, 0
    %v61 = vsel %vm59, 1, 0
    %v62 = vcvt.s32.f32 %v60
    %v63 = vcvt.s32.f32 %v61
    %v64 = vadd.s32 %v54, %v57
    %v65 = vadd.s32 %v55, %v57
    %vm66 = vcmp.eq.s32.totalorder %v64, 15
    %vm67 = vcmp.eq.s32.totalorder %v65, 15
    %v68 = vsel %vm66, 1, 0
    %v69 = vsel %vm67, 1, 0
    %v70 = vcvt.s32.f32 %v68
    %v71 = vcvt.s32.f32 %v69
    loop: start=0, step=1, limit=4
    $region26: #{tpu_custom_call.1} parent=1 // loop_pre_header
      _
    $region27: #{tpu_custom_call.1} parent=1 // loop_header
      %s73 = sphi 0, %s77
      %p74 = scmp.ge.s32.totalorder %s73, 4
    $region28: #{tpu_custom_call.1} parent=1 // loop_header_branch
      %76 = sbr.rel (%p74) target = $region32
    $region29: #{tpu_custom_call.1} parent=1 // loop_body
      %s78 = sadd.s32 %s52, %s73
      %s79 = smul.u32 %s78, 5
      %s80 = sld [smem:[#allocation2 + %s79]]
      %s81 = sadd.s32 %s79, 1
      %s82 = sld [smem:[#allocation2 + %s81]]
      %s83 = sadd.s32 %s79, 2
      %s84 = sld [smem:[#allocation2 + %s83]]
      %s85 = sadd.s32 %s79, 3
      %s86 = sld [smem:[#allocation2 + %s85]]
      %s87 = sadd.s32 %s79, 4
      %s88 = sld [smem:[#allocation2 + %s87]]
      %s89 = smul.u32 %s78, 2
      %s90 = sld [smem:[#allocation7 + %s89]]
      %s91 = sadd.s32 %s89, 1
      %s92 = sld [smem:[#allocation7 + %s91]]
      %s93 = sadd.f32 %s82, %s86
      %s94 = ssub.f32 1.0, %s93
      %s95 = ssub.f32 1.0, %s88
      %s96 = smul.f32 %s82, %s80
      %s97 = ssub.f32 1.0, %s80
      %s98 = smul.f32 %s86, %s97
      %s99 = sadd.f32 %s96, %s98
      %s100 = smul.f32 %s82, %s97
      %s101 = smul.f32 %s86, %s80
      %s102 = sadd.f32 %s100, %s101
      %s103 = smul.f32 %s80, %s84
      %s104 = ssub.f32 1.0, %s84
      %s105 = smul.f32 %s97, %s104
      %s106 = sadd.f32 %s103, %s105
      %s107 = smul.f32 %s80, %s104
      %s108 = smul.f32 %s97, %s84
      %s109 = sadd.f32 %s107, %s108
      %s110 = smul.f32 %s94, %s106
      %s111 = sadd.f32 %s82, %s110
      %s112 = smul.f32 %s94, %s109
      %s113 = sadd.f32 %s86, %s112
      %s114 = smul.f32 %s94, %s95
      %s115 = smul.f32 %s114, %s104
      %s116 = smul.f32 %s114, %s84
      %s117 = smul.f32 %s94, %s88
      %s118 = smul.f32 %s117, %s104
      %s119 = smul.f32 %s117, %s84
      %s120 = smul.f32 %s95, %s99
      %s121 = smul.f32 %s95, %s102
      %s122 = smul.f32 %s88, %s99
      %s123 = smul.f32 %s88, %s102
      %s124 = smul.f32 %s95, %s111
      %s125 = smul.f32 %s95, %s113
      %s126 = smul.f32 %s88, %s111
      %s127 = smul.f32 %s88, %s113
      %v128 = vsub.s32 %v54, %v57
      %v129 = vsub.s32 %v55, %v57
      %v130 = vstv %s90
      %vm131 = vcmp.eq.s32.totalorder %v128, %v130
      %vm132 = vcmp.eq.s32.totalorder %v129, %v130
      %v133 = vsel %vm131, 1, 0
      %v134 = vsel %vm132, 1, 0
      %v135 = vcvt.s32.f32 %v133
      %v136 = vcvt.s32.f32 %v134
      %s137 = sadd.s32 %s90, 15
      %v138 = vstv %s137
      %vm139 = vcmp.eq.s32.totalorder %v64, %v138
      %vm140 = vcmp.eq.s32.totalorder %v65, %v138
      %v141 = vsel %vm139, 1, 0
      %v142 = vsel %vm140, 1, 0
      %v143 = vcvt.s32.f32 %v141
      %v144 = vcvt.s32.f32 %v142
      %v145 = vsub.s32 %v57, %v54
      %v146 = vsub.s32 %v57, %v55
      %v147 = vstv %s92
      %vm148 = vcmp.eq.s32.totalorder %v145, %v147
      %vm149 = vcmp.eq.s32.totalorder %v146, %v147
      %v150 = vsel %vm148, 1, 0
      %v151 = vsel %vm149, 1, 0
      %v152 = vcvt.s32.f32 %v150
      %v153 = vcvt.s32.f32 %v151
      %s154 = sadd.s32 %s92, 15
      %v155 = vstv %s154
      %vm156 = vcmp.eq.s32.totalorder %v64, %v155
      %vm157 = vcmp.eq.s32.totalorder %v65, %v155
      %v158 = vsel %vm156, 1, 0
      %v159 = vsel %vm157, 1, 0
      %v160 = vcvt.s32.f32 %v158
      %v161 = vcvt.s32.f32 %v159
      %v162 = vstv %s115
      %v163 = vmul.f32 %v162, %v62
      %v164 = vmul.f32 %v162, %v63
      %v165 = vstv %s116
      %v166 = vmul.f32 %v165, %v70
      %v167 = vmul.f32 %v165, %v71
      %v168 = vadd.f32 %v163, %v166
      %v169 = vadd.f32 %v164, %v167
      %v170 = vstv %s118
      %v171 = vmul.f32 %v170, %v135
      %v172 = vmul.f32 %v170, %v136
      %v173 = vadd.f32 %v168, %v171
      %v174 = vadd.f32 %v169, %v172
      %v175 = vstv %s119
      %v176 = vmul.f32 %v175, %v143
      %v177 = vmul.f32 %v175, %v144
      %v178 = vadd.f32 %v173, %v176
      %v179 = vadd.f32 %v174, %v177
      %v180 = vstv %s120
      %v181 = vmul.f32 %v180, %v62
      %v182 = vmul.f32 %v180, %v63
      %v183 = vstv %s121
      %v184 = vmul.f32 %v183, %v70
      %v185 = vmul.f32 %v183, %v71
      %v186 = vadd.f32 %v181, %v184
      %v187 = vadd.f32 %v182, %v185
      %v188 = vstv %s122
      %v189 = vmul.f32 %v188, %v135
      %v190 = vmul.f32 %v188, %v136
      %v191 = vadd.f32 %v186, %v189
      %v192 = vadd.f32 %v187, %v190
      %v193 = vstv %s123
      %v194 = vmul.f32 %v193, %v143
      %v195 = vmul.f32 %v193, %v144
      %v196 = vadd.f32 %v191, %v194
      %v197 = vadd.f32 %v192, %v195
      %v198 = vstv %s124
      %v199 = vmul.f32 %v198, %v62
      %v200 = vmul.f32 %v198, %v63
      %v201 = vstv %s125
      %v202 = vmul.f32 %v201, %v70
      %v203 = vmul.f32 %v201, %v71
      %v204 = vadd.f32 %v199, %v202
      %v205 = vadd.f32 %v200, %v203
      %v206 = vstv %s126
      %v207 = vmul.f32 %v206, %v152
      %v208 = vmul.f32 %v206, %v153
      %v209 = vadd.f32 %v204, %v207
      %v210 = vadd.f32 %v205, %v208
      %v211 = vstv %s127
      %v212 = vmul.f32 %v211, %v160
      %v213 = vmul.f32 %v211, %v161
      %v214 = vadd.f32 %v209, %v212
      %v215 = vadd.f32 %v210, %v213
      %s216 = smul.u32 %s73, 48
      %s217 = scalar_lea.vmem [#allocation8], %s216
      %v218 = vld [vmem:[%s217] sm:$0xff]
      %v219 = vld [vmem:[%s217 + $0x8] sm:$0xff]
      %v220 = vld [vmem:[%s217 + $0x10] sm:$0xff]
      %v221 = vld [vmem:[%s217 + $0x18] sm:$0xff]
      %v222 = vld [vmem:[%s217 + $0x20] sm:$0xff]
      %v223 = vld [vmem:[%s217 + $0x28] sm:$0xff]
      %vm224 = vcmask 130048
      %v226 = vsel %vm224, %v196, 0
      %v229 = vsel %vm224, %v197, 0
      %v232 = vsel %vm224, %v218, 0
      %v235 = vsel %vm224, %v219, 0
      %237 = vmatprep.subr.mxu0 0.0
      %238 = vmatpush1.xpose.msra.mxu0 %v232
      %239 = vmatprep.subr.mxu0 0.0
      %240 = vmatpush1.xpose.msra.mxu0 %v235
      %241 = vmatprep.subr.mxu0 0.0
      %242 = vmatpush1.xpose.msra.mxu0 0.0
      %243 = vmatprep.subr.mxu0 0.0
      %244 = vmatpush1.xpose.msra.mxu0 0.0
      %245 = vmatprep.subr.mxu0 0.0
      %246 = vmatpush1.xpose.msra.mxu0 0.0
      %247 = vmatprep.subr.mxu0 0.0
      %248 = vmatpush1.xpose.msra.mxu0 0.0
      %249 = vmatprep.subr.mxu0 0.0
      %250 = vmatpush1.xpose.msra.mxu0 0.0
      %251 = vmatprep.subr.mxu0 0.0
      %252 = vmatpush1.xpose.msra.mxu0 0.0
      %253 = vmatprep.subr.mxu0 0.0
      %254 = vmatpush1.xpose.msra.mxu0 0.0
      %255 = vmatprep.subr.mxu0 0.0
      %256 = vmatpush1.xpose.msra.mxu0 0.0
      %257 = vmatprep.subr.mxu0 0.0
      %258 = vmatpush1.xpose.msra.mxu0 0.0
      %259 = vmatprep.subr.mxu0 0.0
      %260 = vmatpush1.xpose.msra.mxu0 0.0
      %261 = vmatprep.subr.mxu0 0.0
      %262 = vmatpush1.xpose.msra.mxu0 0.0
      %263 = vmatprep.subr.mxu0 0.0
      %264 = vmatpush1.xpose.msra.mxu0 0.0
      %265 = vmatprep.subr.mxu0 0.0
      %266 = vmatpush1.xpose.msra.mxu0 0.0
      %267 = vmatprep.subr.mxu0 0.0
      %268 = vmatpush1.xpose.msra.mxu0 0.0
      %269 = vmatprep.subr.mxu0 0.0
      %270 = vmatpush1.xpose.msra.mxu0 0.0
      %271 = vmatprep.subr.mxu0 0.0
      %272 = vmatpush1.xpose.msra.mxu0 0.0
      %273 = vmatprep.subr.mxu0 0.0
      %274 = vmatpush1.xpose.msra.mxu0 0.0
      %275 = vmatprep.subr.mxu0 0.0
      %276 = vmatpush1.xpose.msra.mxu0 0.0
      %277 = vmatprep.subr.mxu0 0.0
      %278 = vmatpush1.xpose.msra.mxu0 0.0
      %279 = vmatprep.subr.mxu0 0.0
      %280 = vmatpush1.xpose.msra.mxu0 0.0
      %281 = vmatprep.subr.mxu0 0.0
      %282 = vmatpush1.xpose.msra.mxu0 0.0
      %283 = vmatprep.subr.mxu0 0.0
      %284 = vmatpush1.xpose.msra.mxu0 0.0
      %285 = vmatprep.subr.mxu0 0.0
      %286 = vmatpush1.xpose.msra.mxu0 0.0
      %287 = vmatprep.subr.mxu0 0.0
      %288 = vmatpush1.xpose.msra.mxu0 0.0
      %289 = vmatprep.subr.mxu0 0.0
      %290 = vmatpush1.xpose.msra.mxu0 0.0
      %291 = vmatprep.subr.mxu0 0.0
      %292 = vmatpush1.xpose.msra.mxu0 0.0
      %293 = vmatprep.subr.mxu0 0.0
      %294 = vmatpush1.xpose.msra.mxu0 0.0
      %295 = vmatprep.subr.mxu0 0.0
      %296 = vmatpush1.xpose.msra.mxu0 0.0
      %297 = vmatprep.subr.mxu0 0.0
      %298 = vmatpush1.xpose.msra.mxu0 0.0
      %299 = vmatprep.subr.mxu0 0.0
      %300 = vmatpush1.xpose.msra.mxu0 0.0
      %301 = vmatprep.mubr.f32.mxu0 0.0
      %302 = vmatmul.mubr.f32.gmra.mrb[0].mxu0 %v226
      %v303 = vpop.f32.mrb[0].mxu0
      %v304 = vadd.f32 0.0, %v303
      %v305 = vpop.f32.mrb[0].mxu0
      %306 = vmatprep.mubr.f32.mxu0 0.0
      %307 = vmatmul.mubr.f32.gmra.mrb[0].mxu0 %v229
      %v308 = vpop.f32.mrb[0].mxu0
      %v309 = vadd.f32 0.0, %v308
      %v310 = vpop.f32.mrb[0].mxu0
      %311 = vdwg.mxu0
      %v313 = vsel %vm224, %v220, 0
      %v316 = vsel %vm224, %v221, 0
      %318 = vmatprep.subr.mxu0 0.0
      %319 = vmatpush1.xpose.msra.mxu0 %v313
      %320 = vmatprep.subr.mxu0 0.0
      %321 = vmatpush1.xpose.msra.mxu0 %v316
      %322 = vmatprep.subr.mxu0 0.0
      %323 = vmatpush1.xpose.msra.mxu0 0.0
      %324 = vmatprep.subr.mxu0 0.0
      %325 = vmatpush1.xpose.msra.mxu0 0.0
      %326 = vmatprep.subr.mxu0 0.0
      %327 = vmatpush1.xpose.msra.mxu0 0.0
      %328 = vmatprep.subr.mxu0 0.0
      %329 = vmatpush1.xpose.msra.mxu0 0.0
      %330 = vmatprep.subr.mxu0 0.0
      %331 = vmatpush1.xpose.msra.mxu0 0.0
      %332 = vmatprep.subr.mxu0 0.0
      %333 = vmatpush1.xpose.msra.mxu0 0.0
      %334 = vmatprep.subr.mxu0 0.0
      %335 = vmatpush1.xpose.msra.mxu0 0.0
      %336 = vmatprep.subr.mxu0 0.0
      %337 = vmatpush1.xpose.msra.mxu0 0.0
      %338 = vmatprep.subr.mxu0 0.0
      %339 = vmatpush1.xpose.msra.mxu0 0.0
      %340 = vmatprep.subr.mxu0 0.0
      %341 = vmatpush1.xpose.msra.mxu0 0.0
      %342 = vmatprep.subr.mxu0 0.0
      %343 = vmatpush1.xpose.msra.mxu0 0.0
      %344 = vmatprep.subr.mxu0 0.0
      %345 = vmatpush1.xpose.msra.mxu0 0.0
      %346 = vmatprep.subr.mxu0 0.0
      %347 = vmatpush1.xpose.msra.mxu0 0.0
      %348 = vmatprep.subr.mxu0 0.0
      %349 = vmatpush1.xpose.msra.mxu0 0.0
      %350 = vmatprep.subr.mxu0 0.0
      %351 = vmatpush1.xpose.msra.mxu0 0.0
      %352 = vmatprep.subr.mxu0 0.0
      %353 = vmatpush1.xpose.msra.mxu0 0.0
      %354 = vmatprep.subr.mxu0 0.0
      %355 = vmatpush1.xpose.msra.mxu0 0.0
      %356 = vmatprep.subr.mxu0 0.0
      %357 = vmatpush1.xpose.msra.mxu0 0.0
      %358 = vmatprep.subr.mxu0 0.0
      %359 = vmatpush1.xpose.msra.mxu0 0.0
      %360 = vmatprep.subr.mxu0 0.0
      %361 = vmatpush1.xpose.msra.mxu0 0.0
      %362 = vmatprep.subr.mxu0 0.0
      %363 = vmatpush1.xpose.msra.mxu0 0.0
      %364 = vmatprep.subr.mxu0 0.0
      %365 = vmatpush1.xpose.msra.mxu0 0.0
      %366 = vmatprep.subr.mxu0 0.0
      %367 = vmatpush1.xpose.msra.mxu0 0.0
      %368 = vmatprep.subr.mxu0 0.0
      %369 = vmatpush1.xpose.msra.mxu0 0.0
      %370 = vmatprep.subr.mxu0 0.0
      %371 = vmatpush1.xpose.msra.mxu0 0.0
      %372 = vmatprep.subr.mxu0 0.0
      %373 = vmatpush1.xpose.msra.mxu0 0.0
      %374 = vmatprep.subr.mxu0 0.0
      %375 = vmatpush1.xpose.msra.mxu0 0.0
      %376 = vmatprep.subr.mxu0 0.0
      %377 = vmatpush1.xpose.msra.mxu0 0.0
      %378 = vmatprep.subr.mxu0 0.0
      %379 = vmatpush1.xpose.msra.mxu0 0.0
      %380 = vmatprep.subr.mxu0 0.0
      %381 = vmatpush1.xpose.msra.mxu0 0.0
      %382 = vmatprep.mubr.f32.mxu0 0.0
      %383 = vmatmul.mubr.f32.gmra.mrb[0].mxu0 %v226
      %v384 = vpop.f32.mrb[0].mxu0
      %v385 = vadd.f32 0.0, %v384
      %v386 = vpop.f32.mrb[0].mxu0
      %387 = vmatprep.mubr.f32.mxu0 0.0
      %388 = vmatmul.mubr.f32.gmra.mrb[0].mxu0 %v229
      %v389 = vpop.f32.mrb[0].mxu0
      %v390 = vadd.f32 0.0, %v389
      %v391 = vpop.f32.mrb[0].mxu0
      %392 = vdwg.mxu0
      %v394 = vsel %vm224, %v222, 0
      %v397 = vsel %vm224, %v223, 0
      %399 = vmatprep.subr.mxu0 0.0
      %400 = vmatpush1.xpose.msra.mxu0 %v394
      %401 = vmatprep.subr.mxu0 0.0
      %402 = vmatpush1.xpose.msra.mxu0 %v397
      %403 = vmatprep.subr.mxu0 0.0
      %404 = vmatpush1.xpose.msra.mxu0 0.0
      %405 = vmatprep.subr.mxu0 0.0
      %406 = vmatpush1.xpose.msra.mxu0 0.0
      %407 = vmatprep.subr.mxu0 0.0
      %408 = vmatpush1.xpose.msra.mxu0 0.0
      %409 = vmatprep.subr.mxu0 0.0
      %410 = vmatpush1.xpose.msra.mxu0 0.0
      %411 = vmatprep.subr.mxu0 0.0
      %412 = vmatpush1.xpose.msra.mxu0 0.0
      %413 = vmatprep.subr.mxu0 0.0
      %414 = vmatpush1.xpose.msra.mxu0 0.0
      %415 = vmatprep.subr.mxu0 0.0
      %416 = vmatpush1.xpose.msra.mxu0 0.0
      %417 = vmatprep.subr.mxu0 0.0
      %418 = vmatpush1.xpose.msra.mxu0 0.0
      %419 = vmatprep.subr.mxu0 0.0
      %420 = vmatpush1.xpose.msra.mxu0 0.0
      %421 = vmatprep.subr.mxu0 0.0
      %422 = vmatpush1.xpose.msra.mxu0 0.0
      %423 = vmatprep.subr.mxu0 0.0
      %424 = vmatpush1.xpose.msra.mxu0 0.0
      %425 = vmatprep.subr.mxu0 0.0
      %426 = vmatpush1.xpose.msra.mxu0 0.0
      %427 = vmatprep.subr.mxu0 0.0
      %428 = vmatpush1.xpose.msra.mxu0 0.0
      %429 = vmatprep.subr.mxu0 0.0
      %430 = vmatpush1.xpose.msra.mxu0 0.0
      %431 = vmatprep.subr.mxu0 0.0
      %432 = vmatpush1.xpose.msra.mxu0 0.0
      %433 = vmatprep.subr.mxu0 0.0
      %434 = vmatpush1.xpose.msra.mxu0 0.0
      %435 = vmatprep.subr.mxu0 0.0
      %436 = vmatpush1.xpose.msra.mxu0 0.0
      %437 = vmatprep.subr.mxu0 0.0
      %438 = vmatpush1.xpose.msra.mxu0 0.0
      %439 = vmatprep.subr.mxu0 0.0
      %440 = vmatpush1.xpose.msra.mxu0 0.0
      %441 = vmatprep.subr.mxu0 0.0
      %442 = vmatpush1.xpose.msra.mxu0 0.0
      %443 = vmatprep.subr.mxu0 0.0
      %444 = vmatpush1.xpose.msra.mxu0 0.0
      %445 = vmatprep.subr.mxu0 0.0
      %446 = vmatpush1.xpose.msra.mxu0 0.0
      %447 = vmatprep.subr.mxu0 0.0
      %448 = vmatpush1.xpose.msra.mxu0 0.0
      %449 = vmatprep.subr.mxu0 0.0
      %450 = vmatpush1.xpose.msra.mxu0 0.0
      %451 = vmatprep.subr.mxu0 0.0
      %452 = vmatpush1.xpose.msra.mxu0 0.0
      %453 = vmatprep.subr.mxu0 0.0
      %454 = vmatpush1.xpose.msra.mxu0 0.0
      %455 = vmatprep.subr.mxu0 0.0
      %456 = vmatpush1.xpose.msra.mxu0 0.0
      %457 = vmatprep.subr.mxu0 0.0
      %458 = vmatpush1.xpose.msra.mxu0 0.0
      %459 = vmatprep.subr.mxu0 0.0
      %460 = vmatpush1.xpose.msra.mxu0 0.0
      %461 = vmatprep.subr.mxu0 0.0
      %462 = vmatpush1.xpose.msra.mxu0 0.0
      %463 = vmatprep.mubr.f32.mxu0 0.0
      %464 = vmatmul.mubr.f32.gmra.mrb[0].mxu0 %v226
      %v465 = vpop.f32.mrb[0].mxu0
      %v466 = vadd.f32 0.0, %v465
      %v467 = vpop.f32.mrb[0].mxu0
      %468 = vmatprep.mubr.f32.mxu0 0.0
      %469 = vmatmul.mubr.f32.gmra.mrb[0].mxu0 %v229
      %v470 = vpop.f32.mrb[0].mxu0
      %v471 = vadd.f32 0.0, %v470
      %v472 = vpop.f32.mrb[0].mxu0
      %473 = vdwg.mxu0
      %v475 = vsel %vm224, %v178, 0
      %v478 = vsel %vm224, %v179, 0
      %480 = vmatprep.subr.mxu0 0.0
      %481 = vmatpush1.msra.mxu0 %v218
      %482 = vmatprep.subr.mxu0 0.0
      %483 = vmatpush1.msra.mxu0 %v219
      %484 = vmatprep.subr.mxu0 0.0
      %485 = vmatpush1.msra.mxu0 0.0
      %486 = vmatprep.subr.mxu0 0.0
      %487 = vmatpush1.msra.mxu0 0.0
      %488 = vmatprep.subr.mxu0 0.0
      %489 = vmatpush1.msra.mxu0 0.0
      %490 = vmatprep.subr.mxu0 0.0
      %491 = vmatpush1.msra.mxu0 0.0
      %492 = vmatprep.subr.mxu0 0.0
      %493 = vmatpush1.msra.mxu0 0.0
      %494 = vmatprep.subr.mxu0 0.0
      %495 = vmatpush1.msra.mxu0 0.0
      %496 = vmatprep.subr.mxu0 0.0
      %497 = vmatpush1.msra.mxu0 0.0
      %498 = vmatprep.subr.mxu0 0.0
      %499 = vmatpush1.msra.mxu0 0.0
      %500 = vmatprep.subr.mxu0 0.0
      %501 = vmatpush1.msra.mxu0 0.0
      %502 = vmatprep.subr.mxu0 0.0
      %503 = vmatpush1.msra.mxu0 0.0
      %504 = vmatprep.subr.mxu0 0.0
      %505 = vmatpush1.msra.mxu0 0.0
      %506 = vmatprep.subr.mxu0 0.0
      %507 = vmatpush1.msra.mxu0 0.0
      %508 = vmatprep.subr.mxu0 0.0
      %509 = vmatpush1.msra.mxu0 0.0
      %510 = vmatprep.subr.mxu0 0.0
      %511 = vmatpush1.msra.mxu0 0.0
      %512 = vmatprep.subr.mxu0 0.0
      %513 = vmatpush1.msra.mxu0 0.0
      %514 = vmatprep.subr.mxu0 0.0
      %515 = vmatpush1.msra.mxu0 0.0
      %516 = vmatprep.subr.mxu0 0.0
      %517 = vmatpush1.msra.mxu0 0.0
      %518 = vmatprep.subr.mxu0 0.0
      %519 = vmatpush1.msra.mxu0 0.0
      %520 = vmatprep.subr.mxu0 0.0
      %521 = vmatpush1.msra.mxu0 0.0
      %522 = vmatprep.subr.mxu0 0.0
      %523 = vmatpush1.msra.mxu0 0.0
      %524 = vmatprep.subr.mxu0 0.0
      %525 = vmatpush1.msra.mxu0 0.0
      %526 = vmatprep.subr.mxu0 0.0
      %527 = vmatpush1.msra.mxu0 0.0
      %528 = vmatprep.subr.mxu0 0.0
      %529 = vmatpush1.msra.mxu0 0.0
      %530 = vmatprep.subr.mxu0 0.0
      %531 = vmatpush1.msra.mxu0 0.0
      %532 = vmatprep.subr.mxu0 0.0
      %533 = vmatpush1.msra.mxu0 0.0
      %534 = vmatprep.subr.mxu0 0.0
      %535 = vmatpush1.msra.mxu0 0.0
      %536 = vmatprep.subr.mxu0 0.0
      %537 = vmatpush1.msra.mxu0 0.0
      %538 = vmatprep.subr.mxu0 0.0
      %539 = vmatpush1.msra.mxu0 0.0
      %540 = vmatprep.subr.mxu0 0.0
      %541 = vmatpush1.msra.mxu0 0.0
      %542 = vmatprep.subr.mxu0 0.0
      %543 = vmatpush1.msra.mxu0 0.0
      %544 = vmatprep.mubr.f32.mxu0 0.0
      %545 = vmatmul.mubr.f32.gmra.mrb[0].mxu0 %v475
      %v546 = vpop.f32.mrb[0].mxu0
      %v547 = vadd.f32 %v304, %v546
      %v548 = vpop.f32.mrb[0].mxu0
      %549 = vmatprep.mubr.f32.mxu0 0.0
      %550 = vmatmul.mubr.f32.gmra.mrb[0].mxu0 %v478
      %v551 = vpop.f32.mrb[0].mxu0
      %v552 = vadd.f32 %v309, %v551
      %v553 = vpop.f32.mrb[0].mxu0
      %554 = vdwg.mxu0
      %555 = vmatprep.subr.mxu0 0.0
      %556 = vmatpush1.msra.mxu0 %v220
      %557 = vmatprep.subr.mxu0 0.0
      %558 = vmatpush1.msra.mxu0 %v221
      %559 = vmatprep.subr.mxu0 0.0
      %560 = vmatpush1.msra.mxu0 0.0
      %561 = vmatprep.subr.mxu0 0.0
      %562 = vmatpush1.msra.mxu0 0.0
      %563 = vmatprep.subr.mxu0 0.0
      %564 = vmatpush1.msra.mxu0 0.0
      %565 = vmatprep.subr.mxu0 0.0
      %566 = vmatpush1.msra.mxu0 0.0
      %567 = vmatprep.subr.mxu0 0.0
      %568 = vmatpush1.msra.mxu0 0.0
      %569 = vmatprep.subr.mxu0 0.0
      %570 = vmatpush1.msra.mxu0 0.0
      %571 = vmatprep.subr.mxu0 0.0
      %572 = vmatpush1.msra.mxu0 0.0
      %573 = vmatprep.subr.mxu0 0.0
      %574 = vmatpush1.msra.mxu0 0.0
      %575 = vmatprep.subr.mxu0 0.0
      %576 = vmatpush1.msra.mxu0 0.0
      %577 = vmatprep.subr.mxu0 0.0
      %578 = vmatpush1.msra.mxu0 0.0
      %579 = vmatprep.subr.mxu0 0.0
      %580 = vmatpush1.msra.mxu0 0.0
      %581 = vmatprep.subr.mxu0 0.0
      %582 = vmatpush1.msra.mxu0 0.0
      %583 = vmatprep.subr.mxu0 0.0
      %584 = vmatpush1.msra.mxu0 0.0
      %585 = vmatprep.subr.mxu0 0.0
      %586 = vmatpush1.msra.mxu0 0.0
      %587 = vmatprep.subr.mxu0 0.0
      %588 = vmatpush1.msra.mxu0 0.0
      %589 = vmatprep.subr.mxu0 0.0
      %590 = vmatpush1.msra.mxu0 0.0
      %591 = vmatprep.subr.mxu0 0.0
      %592 = vmatpush1.msra.mxu0 0.0
      %593 = vmatprep.subr.mxu0 0.0
      %594 = vmatpush1.msra.mxu0 0.0
      %595 = vmatprep.subr.mxu0 0.0
      %596 = vmatpush1.msra.mxu0 0.0
      %597 = vmatprep.subr.mxu0 0.0
      %598 = vmatpush1.msra.mxu0 0.0
      %599 = vmatprep.subr.mxu0 0.0
      %600 = vmatpush1.msra.mxu0 0.0
      %601 = vmatprep.subr.mxu0 0.0
      %602 = vmatpush1.msra.mxu0 0.0
      %603 = vmatprep.subr.mxu0 0.0
      %604 = vmatpush1.msra.mxu0 0.0
      %605 = vmatprep.subr.mxu0 0.0
      %606 = vmatpush1.msra.mxu0 0.0
      %607 = vmatprep.subr.mxu0 0.0
      %608 = vmatpush1.msra.mxu0 0.0
      %609 = vmatprep.subr.mxu0 0.0
      %610 = vmatpush1.msra.mxu0 0.0
      %611 = vmatprep.subr.mxu0 0.0
      %612 = vmatpush1.msra.mxu0 0.0
      %613 = vmatprep.subr.mxu0 0.0
      %614 = vmatpush1.msra.mxu0 0.0
      %615 = vmatprep.subr.mxu0 0.0
      %616 = vmatpush1.msra.mxu0 0.0
      %617 = vmatprep.subr.mxu0 0.0
      %618 = vmatpush1.msra.mxu0 0.0
      %619 = vmatprep.mubr.f32.mxu0 0.0
      %620 = vmatmul.mubr.f32.gmra.mrb[0].mxu0 %v475
      %v621 = vpop.f32.mrb[0].mxu0
      %v622 = vadd.f32 %v385, %v621
      %v623 = vpop.f32.mrb[0].mxu0
      %624 = vmatprep.mubr.f32.mxu0 0.0
      %625 = vmatmul.mubr.f32.gmra.mrb[0].mxu0 %v478
      %v626 = vpop.f32.mrb[0].mxu0
      %v627 = vadd.f32 %v390, %v626
      %v628 = vpop.f32.mrb[0].mxu0
      %629 = vdwg.mxu0
      %630 = vmatprep.subr.mxu0 0.0
      %631 = vmatpush1.msra.mxu0 %v222
      %632 = vmatprep.subr.mxu0 0.0
      %633 = vmatpush1.msra.mxu0 %v223
      %634 = vmatprep.subr.mxu0 0.0
      %635 = vmatpush1.msra.mxu0 0.0
      %636 = vmatprep.subr.mxu0 0.0
      %637 = vmatpush1.msra.mxu0 0.0
      %638 = vmatprep.subr.mxu0 0.0
      %639 = vmatpush1.msra.mxu0 0.0
      %640 = vmatprep.subr.mxu0 0.0
      %641 = vmatpush1.msra.mxu0 0.0
      %642 = vmatprep.subr.mxu0 0.0
      %643 = vmatpush1.msra.mxu0 0.0
      %644 = vmatprep.subr.mxu0 0.0
      %645 = vmatpush1.msra.mxu0 0.0
      %646 = vmatprep.subr.mxu0 0.0
      %647 = vmatpush1.msra.mxu0 0.0
      %648 = vmatprep.subr.mxu0 0.0
      %649 = vmatpush1.msra.mxu0 0.0
      %650 = vmatprep.subr.mxu0 0.0
      %651 = vmatpush1.msra.mxu0 0.0
      %652 = vmatprep.subr.mxu0 0.0
      %653 = vmatpush1.msra.mxu0 0.0
      %654 = vmatprep.subr.mxu0 0.0
      %655 = vmatpush1.msra.mxu0 0.0
      %656 = vmatprep.subr.mxu0 0.0
      %657 = vmatpush1.msra.mxu0 0.0
      %658 = vmatprep.subr.mxu0 0.0
      %659 = vmatpush1.msra.mxu0 0.0
      %660 = vmatprep.subr.mxu0 0.0
      %661 = vmatpush1.msra.mxu0 0.0
      %662 = vmatprep.subr.mxu0 0.0
      %663 = vmatpush1.msra.mxu0 0.0
      %664 = vmatprep.subr.mxu0 0.0
      %665 = vmatpush1.msra.mxu0 0.0
      %666 = vmatprep.subr.mxu0 0.0
      %667 = vmatpush1.msra.mxu0 0.0
      %668 = vmatprep.subr.mxu0 0.0
      %669 = vmatpush1.msra.mxu0 0.0
      %670 = vmatprep.subr.mxu0 0.0
      %671 = vmatpush1.msra.mxu0 0.0
      %672 = vmatprep.subr.mxu0 0.0
      %673 = vmatpush1.msra.mxu0 0.0
      %674 = vmatprep.subr.mxu0 0.0
      %675 = vmatpush1.msra.mxu0 0.0
      %676 = vmatprep.subr.mxu0 0.0
      %677 = vmatpush1.msra.mxu0 0.0
      %678 = vmatprep.subr.mxu0 0.0
      %679 = vmatpush1.msra.mxu0 0.0
      %680 = vmatprep.subr.mxu0 0.0
      %681 = vmatpush1.msra.mxu0 0.0
      %682 = vmatprep.subr.mxu0 0.0
      %683 = vmatpush1.msra.mxu0 0.0
      %684 = vmatprep.subr.mxu0 0.0
      %685 = vmatpush1.msra.mxu0 0.0
      %686 = vmatprep.subr.mxu0 0.0
      %687 = vmatpush1.msra.mxu0 0.0
      %688 = vmatprep.subr.mxu0 0.0
      %689 = vmatpush1.msra.mxu0 0.0
      %690 = vmatprep.subr.mxu0 0.0
      %691 = vmatpush1.msra.mxu0 0.0
      %692 = vmatprep.subr.mxu0 0.0
      %693 = vmatpush1.msra.mxu0 0.0
      %694 = vmatprep.mubr.f32.mxu0 0.0
      %695 = vmatmul.mubr.f32.gmra.mrb[0].mxu0 %v475
      %v696 = vpop.f32.mrb[0].mxu0
      %v697 = vadd.f32 %v466, %v696
      %v698 = vpop.f32.mrb[0].mxu0
      %699 = vmatprep.mubr.f32.mxu0 0.0
      %700 = vmatmul.mubr.f32.gmra.mrb[0].mxu0 %v478
      %v701 = vpop.f32.mrb[0].mxu0
      %v702 = vadd.f32 %v471, %v701
      %v703 = vpop.f32.mrb[0].mxu0
      %704 = vdwg.mxu0
      %v705 = vsub.s32 %v54, %v130
      %v706 = vsub.s32 %v55, %v130
      %vm707 = vcmp.ge.s32.totalorder %v705, 0
      %vm708 = vcmp.ge.s32.totalorder %v706, 0
      %vm709 = vcmp.lt.s32.totalorder %v705, 16
      %vm710 = vcmp.lt.s32.totalorder %v706, 16
      %vm711 = vmand %vm707, %vm709
      %vm712 = vmand %vm708, %vm710
      %v713 = vsub.s32 %v57, %v147
      %vm714 = vcmp.ge.s32.totalorder %v713, 0
      %vm715 = vmand %vm711, %vm714
      %vm716 = vmand %vm712, %vm714
      %vm717 = vcmp.lt.s32.totalorder %v713, 16
      %vm718 = vmand %vm715, %vm717
      %vm719 = vmand %vm716, %vm717
      %v720 = vsel %vm718, 1, 0
      %v721 = vsel %vm719, 1, 0
      %v722 = vcvt.s32.f32 %v720
      %v723 = vcvt.s32.f32 %v721
      %v724 = vsub.f32 %v722, 1.0
      %v725 = vsub.f32 %v723, 1.0
      %v726 = vstv %s88
      %v727 = vmul.f32 %v726, %v724
      %v728 = vmul.f32 %v726, %v725
      %v730 = vsel %vm224, %v547, 0
      %v733 = vsel %vm224, %v552, 0
      %735 = vmatprep.subr.mxu0 0.0
      %736 = vmatpush1.msra.mxu0 %v214
      %737 = vmatprep.subr.mxu0 0.0
      %738 = vmatpush1.msra.mxu0 %v215
      %739 = vmatprep.subr.mxu0 0.0
      %740 = vmatpush1.msra.mxu0 0.0
      %741 = vmatprep.subr.mxu0 0.0
      %742 = vmatpush1.msra.mxu0 0.0
      %743 = vmatprep.subr.mxu0 0.0
      %744 = vmatpush1.msra.mxu0 0.0
      %745 = vmatprep.subr.mxu0 0.0
      %746 = vmatpush1.msra.mxu0 0.0
      %747 = vmatprep.subr.mxu0 0.0
      %748 = vmatpush1.msra.mxu0 0.0
      %749 = vmatprep.subr.mxu0 0.0
      %750 = vmatpush1.msra.mxu0 0.0
      %751 = vmatprep.subr.mxu0 0.0
      %752 = vmatpush1.msra.mxu0 0.0
      %753 = vmatprep.subr.mxu0 0.0
      %754 = vmatpush1.msra.mxu0 0.0
      %755 = vmatprep.subr.mxu0 0.0
      %756 = vmatpush1.msra.mxu0 0.0
      %757 = vmatprep.subr.mxu0 0.0
      %758 = vmatpush1.msra.mxu0 0.0
      %759 = vmatprep.subr.mxu0 0.0
      %760 = vmatpush1.msra.mxu0 0.0
      %761 = vmatprep.subr.mxu0 0.0
      %762 = vmatpush1.msra.mxu0 0.0
      %763 = vmatprep.subr.mxu0 0.0
      %764 = vmatpush1.msra.mxu0 0.0
      %765 = vmatprep.subr.mxu0 0.0
      %766 = vmatpush1.msra.mxu0 0.0
      %767 = vmatprep.subr.mxu0 0.0
      %768 = vmatpush1.msra.mxu0 0.0
      %769 = vmatprep.subr.mxu0 0.0
      %770 = vmatpush1.msra.mxu0 0.0
      %771 = vmatprep.subr.mxu0 0.0
      %772 = vmatpush1.msra.mxu0 0.0
      %773 = vmatprep.subr.mxu0 0.0
      %774 = vmatpush1.msra.mxu0 0.0
      %775 = vmatprep.subr.mxu0 0.0
      %776 = vmatpush1.msra.mxu0 0.0
      %777 = vmatprep.subr.mxu0 0.0
      %778 = vmatpush1.msra.mxu0 0.0
      %779 = vmatprep.subr.mxu0 0.0
      %780 = vmatpush1.msra.mxu0 0.0
      %781 = vmatprep.subr.mxu0 0.0
      %782 = vmatpush1.msra.mxu0 0.0
      %783 = vmatprep.subr.mxu0 0.0
      %784 = vmatpush1.msra.mxu0 0.0
      %785 = vmatprep.subr.mxu0 0.0
      %786 = vmatpush1.msra.mxu0 0.0
      %787 = vmatprep.subr.mxu0 0.0
      %788 = vmatpush1.msra.mxu0 0.0
      %789 = vmatprep.subr.mxu0 0.0
      %790 = vmatpush1.msra.mxu0 0.0
      %791 = vmatprep.subr.mxu0 0.0
      %792 = vmatpush1.msra.mxu0 0.0
      %793 = vmatprep.subr.mxu0 0.0
      %794 = vmatpush1.msra.mxu0 0.0
      %795 = vmatprep.subr.mxu0 0.0
      %796 = vmatpush1.msra.mxu0 0.0
      %797 = vmatprep.subr.mxu0 0.0
      %798 = vmatpush1.msra.mxu0 0.0
      %799 = vmatprep.mubr.f32.mxu0 0.0
      %800 = vmatmul.mubr.f32.gmra.mrb[0].mxu0 %v730
      %v801 = vpop.f32.mrb[0].mxu0
      %v802 = vadd.f32 %v727, %v801
      %v803 = vpop.f32.mrb[0].mxu0
      %804 = vmatprep.mubr.f32.mxu0 0.0
      %805 = vmatmul.mubr.f32.gmra.mrb[0].mxu0 %v733
      %v806 = vpop.f32.mrb[0].mxu0
      %v807 = vadd.f32 %v728, %v806
      %v808 = vpop.f32.mrb[0].mxu0
      %809 = vdwg.mxu0
      %v811 = vsel %vm224, %v622, 0
      %v814 = vsel %vm224, %v627, 0
      %816 = vmatprep.subr.mxu0 0.0
      %817 = vmatpush1.msra.mxu0 %v214
      %818 = vmatprep.subr.mxu0 0.0
      %819 = vmatpush1.msra.mxu0 %v215
      %820 = vmatprep.subr.mxu0 0.0
      %821 = vmatpush1.msra.mxu0 0.0
      %822 = vmatprep.subr.mxu0 0.0
      %823 = vmatpush1.msra.mxu0 0.0
      %824 = vmatprep.subr.mxu0 0.0
      %825 = vmatpush1.msra.mxu0 0.0
      %826 = vmatprep.subr.mxu0 0.0
      %827 = vmatpush1.msra.mxu0 0.0
      %828 = vmatprep.subr.mxu0 0.0
      %829 = vmatpush1.msra.mxu0 0.0
      %830 = vmatprep.subr.mxu0 0.0
      %831 = vmatpush1.msra.mxu0 0.0
      %832 = vmatprep.subr.mxu0 0.0
      %833 = vmatpush1.msra.mxu0 0.0
      %834 = vmatprep.subr.mxu0 0.0
      %835 = vmatpush1.msra.mxu0 0.0
      %836 = vmatprep.subr.mxu0 0.0
      %837 = vmatpush1.msra.mxu0 0.0
      %838 = vmatprep.subr.mxu0 0.0
      %839 = vmatpush1.msra.mxu0 0.0
      %840 = vmatprep.subr.mxu0 0.0
      %841 = vmatpush1.msra.mxu0 0.0
      %842 = vmatprep.subr.mxu0 0.0
      %843 = vmatpush1.msra.mxu0 0.0
      %844 = vmatprep.subr.mxu0 0.0
      %845 = vmatpush1.msra.mxu0 0.0
      %846 = vmatprep.subr.mxu0 0.0
      %847 = vmatpush1.msra.mxu0 0.0
      %848 = vmatprep.subr.mxu0 0.0
      %849 = vmatpush1.msra.mxu0 0.0
      %850 = vmatprep.subr.mxu0 0.0
      %851 = vmatpush1.msra.mxu0 0.0
      %852 = vmatprep.subr.mxu0 0.0
      %853 = vmatpush1.msra.mxu0 0.0
      %854 = vmatprep.subr.mxu0 0.0
      %855 = vmatpush1.msra.mxu0 0.0
      %856 = vmatprep.subr.mxu0 0.0
      %857 = vmatpush1.msra.mxu0 0.0
      %858 = vmatprep.subr.mxu0 0.0
      %859 = vmatpush1.msra.mxu0 0.0
      %860 = vmatprep.subr.mxu0 0.0
      %861 = vmatpush1.msra.mxu0 0.0
      %862 = vmatprep.subr.mxu0 0.0
      %863 = vmatpush1.msra.mxu0 0.0
      %864 = vmatprep.subr.mxu0 0.0
      %865 = vmatpush1.msra.mxu0 0.0
      %866 = vmatprep.subr.mxu0 0.0
      %867 = vmatpush1.msra.mxu0 0.0
      %868 = vmatprep.subr.mxu0 0.0
      %869 = vmatpush1.msra.mxu0 0.0
      %870 = vmatprep.subr.mxu0 0.0
      %871 = vmatpush1.msra.mxu0 0.0
      %872 = vmatprep.subr.mxu0 0.0
      %873 = vmatpush1.msra.mxu0 0.0
      %874 = vmatprep.subr.mxu0 0.0
      %875 = vmatpush1.msra.mxu0 0.0
      %876 = vmatprep.subr.mxu0 0.0
      %877 = vmatpush1.msra.mxu0 0.0
      %878 = vmatprep.subr.mxu0 0.0
      %879 = vmatpush1.msra.mxu0 0.0
      %880 = vmatprep.mubr.f32.mxu0 0.0
      %881 = vmatmul.mubr.f32.gmra.mrb[0].mxu0 %v811
      %v882 = vpop.f32.mrb[0].mxu0
      %v883 = vadd.f32 %v727, %v882
      %v884 = vpop.f32.mrb[0].mxu0
      %885 = vmatprep.mubr.f32.mxu0 0.0
      %886 = vmatmul.mubr.f32.gmra.mrb[0].mxu0 %v814
      %v887 = vpop.f32.mrb[0].mxu0
      %v888 = vadd.f32 %v728, %v887
      %v889 = vpop.f32.mrb[0].mxu0
      %890 = vdwg.mxu0
      %v892 = vsel %vm224, %v697, 0
      %v895 = vsel %vm224, %v702, 0
      %897 = vmatprep.subr.mxu0 0.0
      %898 = vmatpush1.msra.mxu0 %v214
      %899 = vmatprep.subr.mxu0 0.0
      %900 = vmatpush1.msra.mxu0 %v215
      %901 = vmatprep.subr.mxu0 0.0
      %902 = vmatpush1.msra.mxu0 0.0
      %903 = vmatprep.subr.mxu0 0.0
      %904 = vmatpush1.msra.mxu0 0.0
      %905 = vmatprep.subr.mxu0 0.0
      %906 = vmatpush1.msra.mxu0 0.0
      %907 = vmatprep.subr.mxu0 0.0
      %908 = vmatpush1.msra.mxu0 0.0
      %909 = vmatprep.subr.mxu0 0.0
      %910 = vmatpush1.msra.mxu0 0.0
      %911 = vmatprep.subr.mxu0 0.0
      %912 = vmatpush1.msra.mxu0 0.0
      %913 = vmatprep.subr.mxu0 0.0
      %914 = vmatpush1.msra.mxu0 0.0
      %915 = vmatprep.subr.mxu0 0.0
      %916 = vmatpush1.msra.mxu0 0.0
      %917 = vmatprep.subr.mxu0 0.0
      %918 = vmatpush1.msra.mxu0 0.0
      %919 = vmatprep.subr.mxu0 0.0
      %920 = vmatpush1.msra.mxu0 0.0
      %921 = vmatprep.subr.mxu0 0.0
      %922 = vmatpush1.msra.mxu0 0.0
      %923 = vmatprep.subr.mxu0 0.0
      %924 = vmatpush1.msra.mxu0 0.0
      %925 = vmatprep.subr.mxu0 0.0
      %926 = vmatpush1.msra.mxu0 0.0
      %927 = vmatprep.subr.mxu0 0.0
      %928 = vmatpush1.msra.mxu0 0.0
      %929 = vmatprep.subr.mxu0 0.0
      %930 = vmatpush1.msra.mxu0 0.0
      %931 = vmatprep.subr.mxu0 0.0
      %932 = vmatpush1.msra.mxu0 0.0
      %933 = vmatprep.subr.mxu0 0.0
      %934 = vmatpush1.msra.mxu0 0.0
      %935 = vmatprep.subr.mxu0 0.0
      %936 = vmatpush1.msra.mxu0 0.0
      %937 = vmatprep.subr.mxu0 0.0
      %938 = vmatpush1.msra.mxu0 0.0
      %939 = vmatprep.subr.mxu0 0.0
      %940 = vmatpush1.msra.mxu0 0.0
      %941 = vmatprep.subr.mxu0 0.0
      %942 = vmatpush1.msra.mxu0 0.0
      %943 = vmatprep.subr.mxu0 0.0
      %944 = vmatpush1.msra.mxu0 0.0
      %945 = vmatprep.subr.mxu0 0.0
      %946 = vmatpush1.msra.mxu0 0.0
      %947 = vmatprep.subr.mxu0 0.0
      %948 = vmatpush1.msra.mxu0 0.0
      %949 = vmatprep.subr.mxu0 0.0
      %950 = vmatpush1.msra.mxu0 0.0
      %951 = vmatprep.subr.mxu0 0.0
      %952 = vmatpush1.msra.mxu0 0.0
      %953 = vmatprep.subr.mxu0 0.0
      %954 = vmatpush1.msra.mxu0 0.0
      %955 = vmatprep.subr.mxu0 0.0
      %956 = vmatpush1.msra.mxu0 0.0
      %957 = vmatprep.subr.mxu0 0.0
      %958 = vmatpush1.msra.mxu0 0.0
      %959 = vmatprep.subr.mxu0 0.0
      %960 = vmatpush1.msra.mxu0 0.0
      %961 = vmatprep.mubr.f32.mxu0 0.0
      %962 = vmatmul.mubr.f32.gmra.mrb[0].mxu0 %v892
      %v963 = vpop.f32.mrb[0].mxu0
      %v964 = vadd.f32 %v727, %v963
      %v965 = vpop.f32.mrb[0].mxu0
      %966 = vmatprep.mubr.f32.mxu0 0.0
      %967 = vmatmul.mubr.f32.gmra.mrb[0].mxu0 %v895
      %v968 = vpop.f32.mrb[0].mxu0
      %v969 = vadd.f32 %v728, %v968
      %v970 = vpop.f32.mrb[0].mxu0
      %971 = vdwg.mxu0
      %s972 = scalar_lea.vmem [#allocation9], %s216
      %973 = vst.msk [vmem:[%s972] sm:$0xff] %vm224, %v802
      %974 = vst.msk [vmem:[%s972 + $0x8] sm:$0xff] %vm224, %v807
      %975 = vst.msk [vmem:[%s972 + $0x10] sm:$0xff] %vm224, %v883
      %976 = vst.msk [vmem:[%s972 + $0x18] sm:$0xff] %vm224, %v888
      %977 = vst.msk [vmem:[%s972 + $0x20] sm:$0xff] %vm224, %v964
      %978 = vst.msk [vmem:[%s972 + $0x28] sm:$0xff] %vm224, %v969
    $region30: #{tpu_custom_call.1} parent=1 // loop_footer
      %s77 = sadd.s32 1, %s73
    $region31: #{tpu_custom_call.1} parent=1 // loop_footer_branch
      %72 = sbr.rel target = $region27
    $region32: #{tpu_custom_call.1} parent=1 // loop_exit
      _
    // Predicated region
    $region33: #{tpu_custom_call.1} parent=1 // pred_check
      _
    $region34: #{tpu_custom_call.1} parent=1 // pred_check_branch
      %980 = sbr.rel (0) target = $region36
    $region35: #{tpu_custom_call.1} parent=1 // pred_region
      %s982 = ssub.s32 3072, 3072
      %983 = vsyncadd [#allocation4], %s982
      %s984 = sshll.u32 [#allocation9], 4
      %s985 = int_to_ptr.vmem [resolvable:$true] %s984
      %990 = dma.vmem_to_hbm [thread:$0]  %s985, 3072, %s3, [#allocation4], 128, 128, 8
    $region36: #{tpu_custom_call.1} parent=1 // pred_fallthru
      _
    // Predicated region
    $region37: #{tpu_custom_call.1} parent=1 // pred_check
      _
    $region38: #{tpu_custom_call.1} parent=1 // pred_check_branch
      %992 = sbr.rel (0) target = $region40
    $region39: #{tpu_custom_call.1} parent=1 // pred_region
      %993 = dma.done [#allocation4], 3072
    $region40: #{tpu_custom_call.1} parent=1 // pred_fallthru
      _
    %994 = vsyncpa [#allocation3], 1
    %995 = vsyncpa [#allocation4], 1
    %996 = vsyncpa [#allocation5], 1
    %997 = vsyncpa [#allocation6], 1

</llo_original>
